<compile_context>
chip_gen: v7x
topology: tpu7x:2x2x1
jax: 0.10.0
libtpu: 0.0.40
codegen_flags: <defaults>
</compile_context>

<pallas_src>
import functools

import jax
import jax.numpy as jnp
from jax.experimental import pallas as pl
from jax.experimental.pallas import tpu as pltpu

_PACK = 4  # logical rows packed per physical row in the MXU-packed path


def _cdiv(a, b):
    return -(-a // b)


def _round_up(x, m):
    return _cdiv(x, m) * m


def _pick_tile(n_rows, max_rows):
    """Rows per grid step: multiple of 8, never larger than the array, and
    capped so the grid has >= 2 steps when there is enough work."""
    if n_rows < 8:
        return n_rows                       # full-dim block (allowed by Pallas)
    max_rows = max(8, (max_rows // 8) * 8)
    t = min(max_rows, (n_rows // 8) * 8)    # multiple of 8, <= n_rows
    if n_rows > 256:                        # split across 2 TCs on v7x
        t = min(t, _round_up(_cdiv(n_rows, 2), 8))
    return max(8, t)


def _compiler_params(vmem_est_bytes):
    if vmem_est_bytes > 12 * 2**20:
        return pltpu.CompilerParams(
            dimension_semantics=("parallel",),
            vmem_limit_bytes=min(64 * 2**20,
                                 max(32 * 2**20, int(vmem_est_bytes * 1.5))),
        )
    return pltpu.CompilerParams(dimension_semantics=("parallel",))


def _mlp_kernel(x_ref, w1_ref, b1_ref, w2t_ref, b2_ref, o_ref):
    """Unpacked fallback: x (TB, F) -> out (TB, 1)."""
    h = jnp.dot(x_ref[...], w1_ref[...], preferred_element_type=jnp.float32)
    h = h + b1_ref[...]                       # (TB, H) + (1, H), f32
    h = jnp.maximum(h, 0.01 * h)              # LeakyReLU (PyTorch default 0.01)
    # layer2 (H -> 1) on VPU + lane reduce instead of a 1-column matmul.
    y = jnp.sum(h * w2t_ref[...], axis=-1, keepdims=True) + b2_ref[0]
    o_ref[...] = y.astype(o_ref.dtype)


def _mlp_kernel_packed(x_ref, w1_ref, b1_ref, w2t_ref, b2_ref, o_ref, *,
                       hidden, pack):
    """Packed: x (TB4, pack*F) @ block-diag W1 -> (TB4, pack*H); per-group
    VPU multiply + lane reduce -> out (TB4, pack)."""
    h = jnp.dot(x_ref[...], w1_ref[...], preferred_element_type=jnp.float32)
    h = h + b1_ref[...]                       # (TB4, pack*H) + (1, pack*H)
    h = jnp.maximum(h, 0.01 * h)              # LeakyReLU
    hw = h * w2t_ref[...]                     # (TB4, pack*H)
    b2 = b2_ref[0]                            # scalar bias from SMEM
    for g in range(pack):                     # static unroll, pack = 4
        yg = jnp.sum(hw[:, g * hidden:(g + 1) * hidden], axis=-1,
                     keepdims=True) + b2      # (TB4, 1)
        o_ref[:, g:g + 1] = yg.astype(o_ref.dtype)


def _block_diag(w, pack):
    f, h = w.shape
    out = jnp.zeros((pack * f, pack * h), w.dtype)
    for g in range(pack):
        out = out.at[g * f:(g + 1) * f, g * h:(g + 1) * h].set(w)
    return out


@functools.partial(jax.jit, static_argnames=("block_b",))
def classification_net(x, w1, b1, w2, b2, *, block_b=8192):
    """x: (B, F); w1: (F, H); b1: (H,); w2: (H, 1); b2: (1,). Returns (B, 1)."""
    B, F = x.shape
    H = w1.shape[1]
    out_dtype = x.dtype
    b2_s = b2.reshape(1).astype(jnp.float32)           # scalar bias -> SMEM

    if B % _PACK == 0:
        # ---- MXU-packed path: 4 logical rows per physical row ----
        B4 = B // _PACK
        x_p = x.reshape(B4, _PACK * F)                  # free row-major reshape
        w1_p = _block_diag(w1, _PACK).astype(x.dtype)   # (4F, 4H), VMEM-resident
        b1_p = jnp.tile(b1.astype(jnp.float32), _PACK).reshape(1, _PACK * H)
        w2t_p = jnp.tile(w2.reshape(-1).astype(jnp.float32),
                         _PACK).reshape(1, _PACK * H)

        tb4 = _pick_tile(B4, max(8, block_b // _PACK))
        grid = (_cdiv(B4, tb4),)
        est = (2 * tb4 * _PACK * F * x.dtype.itemsize       # x (double-buffered)
               + _PACK * F * _PACK * H * x.dtype.itemsize   # W1 block-diag
               + 3 * tb4 * _PACK * H * 4                    # h / hw f32 temps
               + 2 * tb4 * _PACK * out_dtype.itemsize       # out
               + 2 * _PACK * H * 4)

        out = pl.pallas_call(
            functools.partial(_mlp_kernel_packed, hidden=H, pack=_PACK),
            out_shape=jax.ShapeDtypeStruct((B4, _PACK), out_dtype),
            grid=grid,
            in_specs=[
                pl.BlockSpec((tb4, _PACK * F), lambda i: (i, 0)),        # x
                pl.BlockSpec((_PACK * F, _PACK * H), lambda i: (0, 0)),  # W1
                pl.BlockSpec((1, _PACK * H), lambda i: (0, 0)),          # b1
                pl.BlockSpec((1, _PACK * H), lambda i: (0, 0)),          # w2^T
                pl.BlockSpec(memory_space=pltpu.MemorySpace.SMEM),       # b2
            ],
            out_specs=pl.BlockSpec((tb4, _PACK), lambda i: (i, 0)),
            compiler_params=_compiler_params(est),
        )(x_p, w1_p, b1_p, w2t_p, b2_s)
        return out.reshape(B, 1)                         # free reshape

    # ---- unpacked fallback (B % 4 != 0): no padding, ragged last block ----
    w1_c = w1.astype(x.dtype)
    b1_2d = b1.reshape(1, H).astype(jnp.float32)
    w2t = w2.reshape(1, H).astype(jnp.float32)

    tb = _pick_tile(B, block_b)
    grid = (_cdiv(B, tb),)
    est = (2 * tb * F * x.dtype.itemsize + F * H * x.dtype.itemsize
           + 3 * tb * H * 4 + 2 * tb * out_dtype.itemsize + 2 * H * 4)

    out = pl.pallas_call(
        _mlp_kernel,
        out_shape=jax.ShapeDtypeStruct((B, 1), out_dtype),
        grid=grid,
        in_specs=[
            pl.BlockSpec((tb, F), lambda i: (i, 0)),     # x, streamed per tile
            pl.BlockSpec((F, H), lambda i: (0, 0)),      # W1, VMEM-resident
            pl.BlockSpec((1, H), lambda i: (0, 0)),      # b1
            pl.BlockSpec((1, H), lambda i: (0, 0)),      # w2^T
            pl.BlockSpec(memory_space=pltpu.MemorySpace.SMEM),  # b2 scalar
        ],
        out_specs=pl.BlockSpec((tb, 1), lambda i: (i, 0)),
        compiler_params=_compiler_params(est),
    )(x, w1_c, b1_2d, w2t, b2_s)
    return out


def _init_params(key, in_features, hidden_size, dtype=jnp.float32):
    # Deterministic init mimicking nn.Linear's U(-1/sqrt(fan_in), 1/sqrt(fan_in)).
    k1, k2, k3, k4 = jax.random.split(key, 4)
    lim1 = 1.0 / jnp.sqrt(in_features)
    lim2 = 1.0 / jnp.sqrt(hidden_size)
    w1 = jax.random.uniform(k1, (in_features, hidden_size), dtype, -lim1, lim1)
    b1 = jax.random.uniform(k2, (hidden_size,), dtype, -lim1, lim1)
    w2 = jax.random.uniform(k3, (hidden_size, 1), dtype, -lim2, lim2)
    b2 = jax.random.uniform(k4, (1,), dtype, -lim2, lim2)
    return w1, b1, w2, b2


def _reference(x, w1, b1, w2, b2):
    h = x @ w1 + b1
    h = jnp.where(h > 0, h, 0.01 * h)
    return h @ w2 + b2


if __name__ == "__main__":
    F, H = 32, 64  # in_features, hidden_size
    key = jax.random.PRNGKey(0)
    kx, kp = jax.random.split(key)
    w1, b1, w2, b2 = _init_params(kp, F, H)

    # 1) small batch (single tile), packed path (B % 4 == 0), fp32
    B = 8
    x = jax.random.normal(kx, (B, F), jnp.float32)
    out = jax.block_until_ready(classification_net(x, w1, b1, w2, b2))
    ref = _reference(x, w1, b1, w2, b2)
    assert out.shape == (B, 1), out.shape
    assert jnp.allclose(out, ref, atol=1e-4, rtol=1e-4), "packed fp32 mismatch"

    # 2) multi-tile packed path with ragged last block (no padding pass)
    B2 = 2500
    x2 = jax.random.normal(kx, (B2, F), jnp.float32)
    out2 = jax.block_until_ready(
        classification_net(x2, w1, b1, w2, b2, block_b=1024))
    ref2 = _reference(x2, w1, b1, w2, b2)
    assert out2.shape == (B2, 1), out2.shape
    assert jnp.allclose(out2, ref2, atol=1e-4, rtol=1e-4), "tiled packed mismatch"

    # 3) unpacked fallback (B % 4 != 0), ragged multi-tile grid
    B3 = 1021
    x3 = jax.random.normal(kx, (B3, F), jnp.float32)
    out3 = jax.block_until_ready(
        classification_net(x3, w1, b1, w2, b2, block_b=512))
    ref3 = _reference(x3, w1, b1, w2, b2)
    assert out3.shape == (B3, 1), out3.shape
    assert jnp.allclose(out3, ref3, atol=1e-4, rtol=1e-4), "fallback mismatch"

    print("KERNEL_OK")
</pallas_src>

<mosaic_0001>
module attributes {stable_mosaic.version = 11 : i64} {
  func.func @_mlp_kernel_packed(%arg0: i32, %arg1: memref<2x128xf32, #tpu.memory_space<vmem>>, %arg2: memref<128x256xf32, #tpu.memory_space<vmem>>, %arg3: memref<1x256xf32, #tpu.memory_space<vmem>>, %arg4: memref<1x256xf32, #tpu.memory_space<vmem>>, %arg5: memref<1xf32, #tpu.memory_space<smem>>, %arg6: memref<2x4xf32, #tpu.memory_space<vmem>>) attributes {dimension_semantics = [#tpu.dimension_semantics<parallel>], iteration_bounds = array<i64: 1>, scalar_prefetch = 0 : i64, scratch_operands = 0 : i64, tpu.core_type = #tpu.core_type<tc>, window_params = [{transform_indices = @transform_0, window_bounds = array<i64: 2, 128>}, {pipeline_mode = #tpu.pipeline_mode<synchronous>, transform_indices = @transform_1, window_bounds = array<i64: 128, 256>}, {pipeline_mode = #tpu.pipeline_mode<synchronous>, transform_indices = @transform_2, window_bounds = array<i64: 1, 256>}, {pipeline_mode = #tpu.pipeline_mode<synchronous>, transform_indices = @transform_3, window_bounds = array<i64: 1, 256>}, {transform_indices = @transform_4, window_bounds = array<i64: 1>}, {transform_indices = @transform_5, window_bounds = array<i64: 2, 4>}]} {
    %c0 = arith.constant 0 : index
    %c0_0 = arith.constant 0 : index
    %0 = vector.load %arg1[%c0, %c0_0] : memref<2x128xf32, #tpu.memory_space<vmem>>, vector<2x128xf32>
    %c0_1 = arith.constant 0 : index
    %c0_2 = arith.constant 0 : index
    %1 = vector.load %arg2[%c0_1, %c0_2] : memref<128x256xf32, #tpu.memory_space<vmem>>, vector<128x256xf32>
    %cst = arith.constant dense<0.000000e+00> : vector<2x256xf32>
    %2 = tpu.matmul %0, %1, %cst {dimension_numbers = #tpu.dot_dimension_numbers<[1], [0], [0], [1], [0, 0, 1, 1], [], []>} : vector<2x128xf32>, vector<128x256xf32>, vector<2x256xf32> -> vector<2x256xf32>
    %c0_3 = arith.constant 0 : index
    %c0_4 = arith.constant 0 : index
    %3 = vector.load %arg3[%c0_3, %c0_4] : memref<1x256xf32, #tpu.memory_space<vmem>>, vector<1x256xf32>
    %4 = vector.broadcast %3 : vector<1x256xf32> to vector<2x256xf32>
    %5 = arith.addf %2, %4 : vector<2x256xf32>
    %cst_5 = arith.constant 0.00999999977 : f32
    %6 = vector.broadcast %cst_5 : f32 to vector<2x256xf32>
    %7 = arith.mulf %6, %5 : vector<2x256xf32>
    %8 = arith.maximumf %5, %7 : vector<2x256xf32>
    %c0_6 = arith.constant 0 : index
    %c0_7 = arith.constant 0 : index
    %9 = vector.load %arg4[%c0_6, %c0_7] : memref<1x256xf32, #tpu.memory_space<vmem>>, vector<1x256xf32>
    %10 = vector.broadcast %9 : vector<1x256xf32> to vector<2x256xf32>
    %11 = arith.mulf %8, %10 : vector<2x256xf32>
    %c0_8 = arith.constant 0 : index
    %12 = memref.load %arg5[%c0_8] : memref<1xf32, #tpu.memory_space<smem>>
    %13 = vector.extract_strided_slice %11 {offsets = [0, 0], sizes = [2, 64], strides = [1, 1]} : vector<2x256xf32> to vector<2x64xf32>
    %cst_9 = arith.constant dense<0.000000e+00> : vector<2xf32>
    %14 = vector.multi_reduction <add>, %13, %cst_9 [1] : vector<2x64xf32> to vector<2xf32>
    %15 = vector.shape_cast %14 : vector<2xf32> to vector<2x1xf32>
    %16 = vector.broadcast %12 : f32 to vector<2x1xf32>
    %17 = arith.addf %15, %16 : vector<2x1xf32>
    %c0_10 = arith.constant 0 : index
    %c0_11 = arith.constant 0 : index
    %18 = vector.load %arg6[%c0_10, %c0_11] : memref<2x4xf32, #tpu.memory_space<vmem>>, vector<2x1xf32>
    tpu.vector_store %arg6[%c0_10, %c0_11], %17 {strides = array<i32>} : memref<2x4xf32, #tpu.memory_space<vmem>>, vector<2x1xf32>,
    %19 = vector.extract_strided_slice %11 {offsets = [0, 64], sizes = [2, 64], strides = [1, 1]} : vector<2x256xf32> to vector<2x64xf32>
    %cst_12 = arith.constant dense<0.000000e+00> : vector<2xf32>
    %20 = vector.multi_reduction <add>, %19, %cst_12 [1] : vector<2x64xf32> to vector<2xf32>
    %21 = vector.shape_cast %20 : vector<2xf32> to vector<2x1xf32>
    %22 = vector.broadcast %12 : f32 to vector<2x1xf32>
    %23 = arith.addf %21, %22 : vector<2x1xf32>
    %c0_13 = arith.constant 0 : index
    %c1 = arith.constant 1 : index
    %24 = vector.load %arg6[%c0_13, %c1] : memref<2x4xf32, #tpu.memory_space<vmem>>, vector<2x1xf32>
    tpu.vector_store %arg6[%c0_13, %c1], %23 {strides = array<i32>} : memref<2x4xf32, #tpu.memory_space<vmem>>, vector<2x1xf32>,
    %25 = vector.extract_strided_slice %11 {offsets = [0, 128], sizes = [2, 64], strides = [1, 1]} : vector<2x256xf32> to vector<2x64xf32>
    %cst_14 = arith.constant dense<0.000000e+00> : vector<2xf32>
    %26 = vector.multi_reduction <add>, %25, %cst_14 [1] : vector<2x64xf32> to vector<2xf32>
    %27 = vector.shape_cast %26 : vector<2xf32> to vector<2x1xf32>
    %28 = vector.broadcast %12 : f32 to vector<2x1xf32>
    %29 = arith.addf %27, %28 : vector<2x1xf32>
    %c0_15 = arith.constant 0 : index
    %c2 = arith.constant 2 : index
    %30 = vector.load %arg6[%c0_15, %c2] : memref<2x4xf32, #tpu.memory_space<vmem>>, vector<2x1xf32>
    tpu.vector_store %arg6[%c0_15, %c2], %29 {strides = array<i32>} : memref<2x4xf32, #tpu.memory_space<vmem>>, vector<2x1xf32>,
    %31 = vector.extract_strided_slice %11 {offsets = [0, 192], sizes = [2, 64], strides = [1, 1]} : vector<2x256xf32> to vector<2x64xf32>
    %cst_16 = arith.constant dense<0.000000e+00> : vector<2xf32>
    %32 = vector.multi_reduction <add>, %31, %cst_16 [1] : vector<2x64xf32> to vector<2xf32>
    %33 = vector.shape_cast %32 : vector<2xf32> to vector<2x1xf32>
    %34 = vector.broadcast %12 : f32 to vector<2x1xf32>
    %35 = arith.addf %33, %34 : vector<2x1xf32>
    %c0_17 = arith.constant 0 : index
    %c3 = arith.constant 3 : index
    %36 = vector.load %arg6[%c0_17, %c3] : memref<2x4xf32, #tpu.memory_space<vmem>>, vector<2x1xf32>
    tpu.vector_store %arg6[%c0_17, %c3], %35 {strides = array<i32>} : memref<2x4xf32, #tpu.memory_space<vmem>>, vector<2x1xf32>,
    return
  }
  func.func @transform_0(%arg0: i32) -> (i32, i32) {
    %c0_i32 = arith.constant 0 : i32
    %c0_i32_0 = arith.constant 0 : i32
    return %arg0, %c0_i32 : i32, i32
  }
  func.func @transform_1(%arg0: i32) -> (i32, i32) {
    %c0_i32 = arith.constant 0 : i32
    %c0_i32_0 = arith.constant 0 : i32
    %c0_i32_1 = arith.constant 0 : i32
    return %c0_i32, %c0_i32_0 : i32, i32
  }
  func.func @transform_2(%arg0: i32) -> (i32, i32) {
    %c0_i32 = arith.constant 0 : i32
    %c0_i32_0 = arith.constant 0 : i32
    %c0_i32_1 = arith.constant 0 : i32
    return %c0_i32, %c0_i32_0 : i32, i32
  }
  func.func @transform_3(%arg0: i32) -> (i32, i32) {
    %c0_i32 = arith.constant 0 : i32
    %c0_i32_0 = arith.constant 0 : i32
    %c0_i32_1 = arith.constant 0 : i32
    return %c0_i32, %c0_i32_0 : i32, i32
  }
  func.func @transform_4(%arg0: i32) -> i32 {
    %c0_i32 = arith.constant 0 : i32
    %c0_i32_0 = arith.constant 0 : i32
    return %c0_i32 : i32
  }
  func.func @transform_5(%arg0: i32) -> (i32, i32) {
    %c0_i32 = arith.constant 0 : i32
    %c0_i32_0 = arith.constant 0 : i32
    return %arg0, %c0_i32 : i32, i32
  }
}

</mosaic_0001>

<llo_original>
// kernel: tile.12
$region0: #{tile.12}
  #allocation0 [shape = 's32[1]{0}', space=sflag, size = 0x4, scoped, tag = 'scoped memory for tile.12']
  %s0 = inlined_call_operand.vmem [shape: f32[64], index: 0, kind: input, shape index: {}]
  %s1 = inlined_call_operand.vmem [shape: f32[4,64], index: 1, kind: output, shape index: {}]
  // Predicated region
  $region2: #{tile.12} parent=0 // pred_check
    _
  $region3: #{tile.12} parent=0 // pred_check_branch
    %3 = sbr.rel (0) target = $region5
  $region4: #{tile.12} parent=0 // pred_region
    _
  $region5: #{tile.12} parent=0 // pred_fallthru
    _
  %v4 = vld [vmem:[%s0] ss:$0 sm:$0xff]
  %5 = vst [vmem:[%s1] sm:$0xf] %v4

// kernel: tile.13
$region0: #{tile.13}
  %s0 = inlined_call_operand.vmem [shape: f32[4,64], index: 0, kind: input, shape index: {}]
  %s1 = inlined_call_operand.vmem [shape: f32[1,256], index: 1, kind: output, shape index: {}]
  $region1: #{tile.13} parent=0
    #allocation0 [shape = 'u8[8192]{0}', space=vmem, size = 0x2000, scoped, tag = 'scoped mem for output reshape']
    #allocation1 [shape = 'u8[4096]{0}', space=vmem, size = 0x1000, scoped, tag = 'scoped mem for input reshape']
    %s3 = sshllo.u32 0, 4
    %v4 = vld [vmem:[%s0] sm:%s3]
    %5 = vst [vmem:[#allocation1] sm:%s3] %v4
    %s6 = smov 3
    %v7 = vld [vmem:[#allocation1] ss:$2 sm:%s6]
    %vm8 = vcmask 523264
    %9 = vst.msk [vmem:[#allocation0] ss:$8 sm:$0x3] %vm8, %v7
    %s10 = scalar_lea.vmem [#allocation1], 1
    %s11 = smov 3
    %v12 = vld [vmem:[%s10] ss:$2 sm:%s11]
    %13 = vrot.lane.b32.xlu0 %v12, 64
    %v14 = vpop.permute.xlu0 %13
    %vm15 = vcmask 1048064
    %16 = vst.msk [vmem:[#allocation0] ss:$8 sm:$0x3] %vm15, %v14
    %s18 = sshllo.u32 0, 1
    %v20 = vld [vmem:[#allocation0] sm:%s18]
    %s21 = sshllo.u32 0, 1
    %22 = vst [vmem:[%s1] sm:%s21] %v20
    %s23 = scalar_lea.vmem [#allocation0], 8
    %v24 = vld [vmem:[%s23] sm:%s18]
    %s25 = sshllo.u32 0, 1
    %s26 = scalar_lea.vmem %s1, 1
    %27 = vst [vmem:[%s26] sm:%s25] %v24

// kernel: classification_net.1
$region0: #{classification_net.1}
  #allocation0 [shape = 'u32[]', space=smem, size = 0x4, offset = 0x4, fixed_abs, tag = 'smem constant byte address 0x4 - core index']
  #allocation1 [shape = 'u32[144,128]{1,0:T(1,128)}', space=vmem, size = 0x12000, scoped, tag = 'internal scratch']
  #allocation2 [shape = 'f32[1]{0:T(128)S(6)}', space=smem, size = 0x200, scoped, tag = 'scoped memory for classification_net.1']
  %s0 = inlined_call_operand.vmem [shape: f32[2,128], index: 0, kind: input, shape index: {}]
  %s1 = inlined_call_operand.vmem [shape: f32[128,256], index: 1, kind: input, shape index: {}]
  %s2 = inlined_call_operand.vmem [shape: f32[1,256], index: 2, kind: input, shape index: {}]
  %s3 = inlined_call_operand.vmem [shape: f32[1,256], index: 3, kind: input, shape index: {}]
  %s4 = inlined_call_operand.<no memory space> [shape: f32[1], index: 4, kind: input, shape index: {}]
  %s5 = inlined_call_operand.vmem [shape: f32[2,4], index: 5, kind: output, shape index: {}]
  %s6 = sld [smem:[#allocation0]]
  $region30: #{classification_net.1} parent=0
    _
  %s8 = ssub.s32 1, %s6
  %s9 = scalar_select 0, %s8, %s6
  %10 = sst [smem:[#allocation2]] %s4
  // Predicated region
  $region2: #{classification_net.1} parent=0 // pred_check
    _
  $region3: #{classification_net.1} parent=0 // pred_check_branch
    %12 = sbr.rel (0) target = $region5
  $region4: #{classification_net.1} parent=0 // pred_region
    _
  $region5: #{classification_net.1} parent=0 // pred_fallthru
    _
  // Predicated region
  $region6: #{classification_net.1} parent=0 // pred_check
    _
  $region7: #{classification_net.1} parent=0 // pred_check_branch
    %14 = sbr.rel (0) target = $region9
  $region8: #{classification_net.1} parent=0 // pred_region
    _
  $region9: #{classification_net.1} parent=0 // pred_fallthru
    _
  // Predicated region
  $region10: #{classification_net.1} parent=0 // pred_check
    _
  $region11: #{classification_net.1} parent=0 // pred_check_branch
    %16 = sbr.rel (0) target = $region13
  $region12: #{classification_net.1} parent=0 // pred_region
    _
  $region13: #{classification_net.1} parent=0 // pred_fallthru
    _
  // Predicated region
  $region14: #{classification_net.1} parent=0 // pred_check
    _
  $region15: #{classification_net.1} parent=0 // pred_check_branch
    %18 = sbr.rel (0) target = $region17
  $region16: #{classification_net.1} parent=0 // pred_region
    _
  $region17: #{classification_net.1} parent=0 // pred_fallthru
    _
  // Predicated region
  $region18: #{classification_net.1} parent=0 // pred_check
    _
  $region19: #{classification_net.1} parent=0 // pred_check_branch
    %20 = sbr.rel (0) target = $region21
  $region20: #{classification_net.1} parent=0 // pred_region
    _
  $region21: #{classification_net.1} parent=0 // pred_fallthru
    _
  %v21 = vld [vmem:[%s0] sm:$0x3]
  %v22 = vld [vmem:[%s1] sm:$0xff]
  %v23 = vld [vmem:[%s1 + $0x8] sm:$0xff]
  %v24 = vld [vmem:[%s1 + $0x10] sm:$0xff]
  %v25 = vld [vmem:[%s1 + $0x18] sm:$0xff]
  %v26 = vld [vmem:[%s1 + $0x20] sm:$0xff]
  %v27 = vld [vmem:[%s1 + $0x28] sm:$0xff]
  %v28 = vld [vmem:[%s1 + $0x30] sm:$0xff]
  %v29 = vld [vmem:[%s1 + $0x38] sm:$0xff]
  %v30 = vld [vmem:[%s1 + $0x40] sm:$0xff]
  %v31 = vld [vmem:[%s1 + $0x48] sm:$0xff]
  %v32 = vld [vmem:[%s1 + $0x50] sm:$0xff]
  %v33 = vld [vmem:[%s1 + $0x58] sm:$0xff]
  %v34 = vld [vmem:[%s1 + $0x60] sm:$0xff]
  %v35 = vld [vmem:[%s1 + $0x68] sm:$0xff]
  %v36 = vld [vmem:[%s1 + $0x70] sm:$0xff]
  %v37 = vld [vmem:[%s1 + $0x78] sm:$0xff]
  %v38 = vld [vmem:[%s1 + $0x80] sm:$0xff]
  %v39 = vld [vmem:[%s1 + $0x88] sm:$0xff]
  %v40 = vld [vmem:[%s1 + $0x90] sm:$0xff]
  %v41 = vld [vmem:[%s1 + $0x98] sm:$0xff]
  %v42 = vld [vmem:[%s1 + $0xa0] sm:$0xff]
  %v43 = vld [vmem:[%s1 + $0xa8] sm:$0xff]
  %v44 = vld [vmem:[%s1 + $0xb0] sm:$0xff]
  %v45 = vld [vmem:[%s1 + $0xb8] sm:$0xff]
  %v46 = vld [vmem:[%s1 + $0xc0] sm:$0xff]
  %v47 = vld [vmem:[%s1 + $0xc8] sm:$0xff]
  %v48 = vld [vmem:[%s1 + $0xd0] sm:$0xff]
  %v49 = vld [vmem:[%s1 + $0xd8] sm:$0xff]
  %v50 = vld [vmem:[%s1 + $0xe0] sm:$0xff]
  %v51 = vld [vmem:[%s1 + $0xe8] sm:$0xff]
  %v52 = vld [vmem:[%s1 + $0xf0] sm:$0xff]
  %v53 = vld [vmem:[%s1 + $0xf8] sm:$0xff]
  %v54 = vld [vmem:[%s2] sm:$0x3]
  %v56 = vlaneseq
  %v57 = vshrl.u32 %v56, 7
  %v58 = vsub.s32 0, %v57
  %v59 = vrot.slane %v54, %v58
  %v60 = vlaneseq
  %v61 = vshrl.u32 %v60, 7
  %v62 = vsub.s32 1, %v61
  %v63 = vrot.slane %v54, %v62
  %66 = vmatprep.subr.mxu0 %v23
  %67 = vmatpush1.msra.mxu0 %v22
  %68 = vmatprep.subr.mxu0 %v25
  %69 = vmatpush1.msra.mxu0 %v24
  %70 = vmatprep.subr.mxu0 %v27
  %71 = vmatpush1.msra.mxu0 %v26
  %72 = vmatprep.subr.mxu0 %v29
  %73 = vmatpush1.msra.mxu0 %v28
  %74 = vmatprep.subr.mxu0 %v31
  %75 = vmatpush1.msra.mxu0 %v30
  %76 = vmatprep.subr.mxu0 %v33
  %77 = vmatpush1.msra.mxu0 %v32
  %78 = vmatprep.subr.mxu0 %v35
  %79 = vmatpush1.msra.mxu0 %v34
  %80 = vmatprep.subr.mxu0 %v37
  %81 = vmatpush1.msra.mxu0 %v36
  %82 = vmatprep.subr.mxu0 %v39
  %83 = vmatpush1.msra.mxu0 %v38
  %84 = vmatprep.subr.mxu0 %v41
  %85 = vmatpush1.msra.mxu0 %v40
  %86 = vmatprep.subr.mxu0 %v43
  %87 = vmatpush1.msra.mxu0 %v42
  %88 = vmatprep.subr.mxu0 %v45
  %89 = vmatpush1.msra.mxu0 %v44
  %90 = vmatprep.subr.mxu0 %v47
  %91 = vmatpush1.msra.mxu0 %v46
  %92 = vmatprep.subr.mxu0 %v49
  %93 = vmatpush1.msra.mxu0 %v48
  %94 = vmatprep.subr.mxu0 %v51
  %95 = vmatpush1.msra.mxu0 %v50
  %96 = vmatprep.subr.mxu0 %v53
  %97 = vmatpush1.msra.mxu0 %v52
  %98 = vmatprep.subr.mxu0 0.0
  %99 = vmatpush1.msra.mxu0 0.0
  %100 = vmatprep.subr.mxu0 0.0
  %101 = vmatpush1.msra.mxu0 0.0
  %102 = vmatprep.subr.mxu0 0.0
  %103 = vmatpush1.msra.mxu0 0.0
  %104 = vmatprep.subr.mxu0 0.0
  %105 = vmatpush1.msra.mxu0 0.0
  %106 = vmatprep.subr.mxu0 0.0
  %107 = vmatpush1.msra.mxu0 0.0
  %108 = vmatprep.subr.mxu0 0.0
  %109 = vmatpush1.msra.mxu0 0.0
  %110 = vmatprep.subr.mxu0 0.0
  %111 = vmatpush1.msra.mxu0 0.0
  %112 = vmatprep.subr.mxu0 0.0
  %113 = vmatpush1.msra.mxu0 0.0
  %114 = vmatprep.subr.mxu0 0.0
  %115 = vmatpush1.msra.mxu0 0.0
  %116 = vmatprep.subr.mxu0 0.0
  %117 = vmatpush1.msra.mxu0 0.0
  %118 = vmatprep.subr.mxu0 0.0
  %119 = vmatpush1.msra.mxu0 0.0
  %120 = vmatprep.subr.mxu0 0.0
  %121 = vmatpush1.msra.mxu0 0.0
  %122 = vmatprep.subr.mxu0 0.0
  %123 = vmatpush1.msra.mxu0 0.0
  %124 = vmatprep.subr.mxu0 0.0
  %125 = vmatpush1.msra.mxu0 0.0
  %126 = vmatprep.subr.mxu0 0.0
  %127 = vmatpush1.msra.mxu0 0.0
  %128 = vmatprep.subr.mxu0 0.0
  %129 = vmatpush1.msra.mxu0 0.0
  %130 = vmatprep.mubr.f32.mxu0 0.0
  %131 = vmatmul.mubr.f32.gmra.mrb[0].mxu0 %v21
  %v132 = vpop.f32.mrb[0].mxu0
  %v133 = vadd.f32 %v59, %v132
  %v134 = vpop.f32.mrb[0].mxu0
  %v135 = vadd.f32 %v63, %v134
  %136 = vdwg.mxu0
  %v137 = vmul.f32 %v133, 0.01
  %v138 = vmul.f32 %v135, 0.01
  %v139 = vmax.f32 %v133, %v137
  %v140 = vmax.f32 %v135, %v138
  %v141 = vld [vmem:[%s3] sm:$0x3]
  %v143 = vlaneseq
  %v144 = vshrl.u32 %v143, 7
  %v145 = vsub.s32 0, %v144
  %v146 = vrot.slane %v141, %v145
  %v147 = vlaneseq
  %v148 = vshrl.u32 %v147, 7
  %v149 = vsub.s32 1, %v148
  %v150 = vrot.slane %v141, %v149
  %v153 = vmul.f32 %v139, %v146
  %v154 = vmul.f32 %v140, %v150
  %s155 = sld [smem:[#allocation2]]
  %vm156 = vcmask 517120
  %v157 = vsel %vm156, %v153, 0.0
  %158 = vadd.xlane.f32.xlu0 %v157
  %v159 = vpop.xlane.xlu0 %158
  %v160 = vstv %s155
  %v161 = vadd.f32 %v159, %v160
  %vm162 = vcmask 1024
  %163 = vst.msk [vmem:[%s5] sm:$0x3] %vm162, %v161
  %165 = vrot.lane.b32.xlu0 %v153, 64
  %v166 = vpop.permute.xlu0 %165
  %v168 = vsel %vm156, %v166, 0.0
  %169 = vadd.xlane.f32.xlu0 %v168
  %v170 = vpop.xlane.xlu0 %169
  %v171 = vadd.f32 %v170, %v160
  %vm172 = vcmask 9224
  %173 = vst.msk [vmem:[%s5] sm:$0x3] %vm172, %v171
  %v174 = vsel %vm156, %v154, 0.0
  %175 = vadd.xlane.f32.xlu0 %v174
  %v176 = vpop.xlane.xlu0 %175
  %v177 = vadd.f32 %v176, %v160
  %vm178 = vcmask 17424
  %179 = vst.msk [vmem:[%s5] sm:$0x3] %vm178, %v177
  %181 = vrot.lane.b32.xlu0 %v154, 64
  %v182 = vpop.permute.xlu0 %181
  %v184 = vsel %vm156, %v182, 0.0
  %185 = vadd.xlane.f32.xlu0 %v184
  %v186 = vpop.xlane.xlu0 %185
  %v187 = vadd.f32 %v186, %v160
  %vm188 = vcmask 25624
  %189 = vst.msk [vmem:[%s5] sm:$0x3] %vm188, %v187
  // Predicated region
  $region22: #{classification_net.1} parent=0 // pred_check
    _
  $region23: #{classification_net.1} parent=0 // pred_check_branch
    %191 = sbr.rel (0) target = $region25
  $region24: #{classification_net.1} parent=0 // pred_region
    _
  $region25: #{classification_net.1} parent=0 // pred_fallthru
    _
  // Predicated region
  $region26: #{classification_net.1} parent=0 // pred_check
    _
  $region27: #{classification_net.1} parent=0 // pred_check_branch
    %193 = sbr.rel (0) target = $region29
  $region28: #{classification_net.1} parent=0 // pred_region
    _
  $region29: #{classification_net.1} parent=0 // pred_fallthru
    _

</llo_original>
